<compile_context>
chip_gen: v7x
topology: tpu7x:2x2x1
jax: 0.10.0
libtpu: 0.0.40
codegen_flags: <defaults>
</compile_context>

<pallas_src>
import jax
import jax.numpy as jnp
from jax import lax
from jax.experimental import pallas as pl
from jax.experimental.pallas import tpu as pltpu


def _make_kernel(C, TQ, num_q):
    """Build the per-(batch, query-block) kernel with static C/TQ/num_q."""

    def kernel(gamma_ref, x_ref, wq_ref, bq_ref, wkv_ref, bkv_ref,
               o_ref, vscr, kscr):
        # x_ref   : (C, N)              full spatial block (resident across qi)
        # wq_ref  : (Cq_pad, C) bf16    bq_ref : (Cq_pad, 1) f32
        # wkv_ref : (C+8+Cq_pad, C) bf16  fused [Wv ; ones-row pad ; Wk_pad]
        # bkv_ref : (C+8+Cq_pad, 1) f32
        # o_ref   : (C, TQ)
        # vscr    : (C+8, N) bf16       cached V (+ ones row) projection
        # kscr    : (Cq_pad, N) bf16    cached K projection
        qi = pl.program_id(1)

        # --- K/V projection: once per batch, cached in VMEM scratch ---------
        @pl.when(qi == 0)
        def _():
            x_bf = x_ref[...].astype(jnp.bfloat16)
            kv = jnp.dot(wkv_ref[...], x_bf,
                         preferred_element_type=jnp.float32) + bkv_ref[...]
            # f32 value slices at 8-row boundaries (C % 8 == 0) -> tile aligned.
            vscr[...] = kv[:C + 8, :].astype(jnp.bfloat16)
            kscr[...] = kv[C + 8:, :].astype(jnp.bfloat16)

        # --- query columns: slice from the resident x block (no extra DMA) --
        if num_q == 1:
            x_q = x_ref[...]
        else:
            start = pl.multiple_of(qi * TQ, 128)     # TQ is a 128-multiple here
            x_q = x_ref[:, pl.ds(start, TQ)]
        x_q_f32 = x_q.astype(jnp.float32)

        # --- Q projection over this query block only -------------------------
        q = jnp.dot(wq_ref[...], x_q.astype(jnp.bfloat16),
                    preferred_element_type=jnp.float32) + bq_ref[...]   # (Cq_pad, TQ)

        # energy[i, j] = <q[:, i], k[:, j]>; contract channel axes directly
        # (no explicit transpose of either operand).
        energy = lax.dot_general(q.astype(jnp.bfloat16), kscr[...],
                                 (((0,), (0,)), ((), ())),
                                 preferred_element_type=jnp.float32)    # (TQ, N)

        # Softmax over keys; normalization deferred past the P@V matmul.
        m = jnp.max(energy, axis=-1, keepdims=True)                     # (TQ, 1)
        p = jnp.exp(energy - m).astype(jnp.bfloat16)                    # (TQ, N) bf16

        # One MXU pass produces both the unnormalized output (rows :C) and the
        # softmax denominator (row C, from the built-in ones row of vscr).
        out_full = lax.dot_general(vscr[...], p, (((1,), (1,)), ((), ())),
                                   preferred_element_type=jnp.float32)  # (C+8, TQ)
        out_un = out_full[:C, :]                                        # (C, TQ)
        inv_l = pl.reciprocal(out_full[C:C + 1, :], approx=False)       # (1, TQ)

        gamma = gamma_ref[0, 0]
        o_ref[...] = (gamma * (out_un * inv_l) + x_q_f32).astype(o_ref.dtype)

    return kernel


def _pick_q_block(n, vmem_cap_bytes):
    """Query-block size: whole thing when small, else a 128-multiple divisor,
    capped lower on small-VMEM parts (v7x: 64 MiB)."""
    if n <= 512:
        return n
    max_tq = 512 if vmem_cap_bytes <= 64 * 1024 * 1024 else 1024
    for tq in (1024, 512, 256, 128):
        if tq <= max_tq and n % tq == 0:
            return tq
    # TODO(synk): ragged N (> 512, not a multiple of 128) falls back to one
    # whole-N query block; for very large ragged N this may exceed VMEM.
    return n


def self_attention_pallas(x_nchw, wq, bq, wk, bk, wv, bv, gamma):
    """x_nchw: (B, C, W, H).  Weights in native torch (C_out, C_in) layout
    (spectral norm already applied), biases 1-D.  Returns (B, C, W, H)."""
    B, C, W, H = x_nchw.shape
    N = W * H
    Cq = wq.shape[0]
    assert C % 8 == 0, "in_dim must be a multiple of 8 (sublane alignment)"
    Cq_pad = ((Cq + 7) // 8) * 8

    f32 = jnp.float32
    bf16 = jnp.bfloat16

    # Zero-pad Wq/Wk output channels to a sublane multiple (zero weight AND
    # zero bias -> exact 0 contribution to the energy; numerics unchanged).
    wq_p = jnp.zeros((Cq_pad, C), f32).at[:Cq].set(wq.astype(f32)).astype(bf16)
    bq_p = jnp.zeros((Cq_pad, 1), f32).at[:Cq, 0].set(bq.astype(f32).ravel())
    wk_p = jnp.zeros((Cq_pad, C), f32).at[:Cq].set(wk.astype(f32))
    bk_p = jnp.zeros((Cq_pad, 1), f32).at[:Cq, 0].set(bk.astype(f32).ravel())

    # Fused projection weight [Wv ; ones-row pad ; Wk_pad].  The 8 pad rows
    # after Wv have zero weights; the first has bias 1.0, so the projected
    # "value" block carries a built-in ones row -> the P@V matmul also yields
    # the softmax denominator (exact).
    ones_w = jnp.zeros((8, C), f32)
    ones_b = jnp.zeros((8, 1), f32).at[0, 0].set(1.0)
    w_kv = jnp.concatenate([wv.astype(f32), ones_w, wk_p], axis=0).astype(bf16)
    b_kv = jnp.concatenate([bv.astype(f32).reshape(C, 1), ones_b, bk_p], axis=0)

    gamma2d = jnp.reshape(gamma.astype(f32), (1, 1))

    # NCHW -> (B, C, N) is a pure reshape: no HBM transpose on either side.
    x_cn = x_nchw.reshape(B, C, N)

    # Generation-aware tiling / scoped-VMEM budget (v7x: 64 MiB physical).
    try:
        vmem_cap = int(pltpu.get_tpu_info().vmem_capacity_bytes)
    except Exception:
        vmem_cap = 128 * 1024 * 1024
    TQ = _pick_q_block(N, vmem_cap)
    num_q = N // TQ if N % TQ == 0 else 1
    vmem_limit = max(32 * 1024 * 1024,
                     min(vmem_cap - 16 * 1024 * 1024, 100 * 1024 * 1024))

    kernel = _make_kernel(C, TQ, num_q)

    out_cn = pl.pallas_call(
        kernel,
        out_shape=jax.ShapeDtypeStruct((B, C, N), x_nchw.dtype),
        grid=(B, num_q),
        in_specs=[
            pl.BlockSpec(memory_space=pltpu.MemorySpace.SMEM),            # gamma
            pl.BlockSpec((None, C, N), lambda b, qi: (b, 0, 0)),          # x (full)
            pl.BlockSpec((Cq_pad, C), lambda b, qi: (0, 0)),              # Wq (padded)
            pl.BlockSpec((Cq_pad, 1), lambda b, qi: (0, 0)),              # bq (padded)
            pl.BlockSpec((C + 8 + Cq_pad, C), lambda b, qi: (0, 0)),      # [Wv;1;Wk]
            pl.BlockSpec((C + 8 + Cq_pad, 1), lambda b, qi: (0, 0)),      # [bv;1;bk]
        ],
        out_specs=pl.BlockSpec((None, C, TQ), lambda b, qi: (b, 0, qi)),
        scratch_shapes=[
            pltpu.VMEM((C + 8, N), jnp.bfloat16),                         # V (+ones)
            pltpu.VMEM((Cq_pad, N), jnp.bfloat16),                        # K
        ],
        compiler_params=pltpu.CompilerParams(
            # batch independent -> "parallel" (v7x 2-TC sharding; no-op on
            # single-TC v5e/v6e); qi carries the cached K/V scratch -> "arbitrary".
            dimension_semantics=("parallel", "arbitrary"),
            vmem_limit_bytes=int(vmem_limit)),
    )(gamma2d, x_cn, wq_p, bq_p, w_kv, b_kv)

    return out_cn.reshape(B, C, W, H)


def _spectral_normalize(w_oc_ic):
    """Exact spectral norm of a (C_out, C_in) 1x1-conv weight matrix.
    (PyTorch uses 1-step power iteration; exact sigma is used here since the
    parameters are synthetic anyway.)"""
    sigma = jnp.linalg.svd(w_oc_ic, compute_uv=False)[0]
    return w_oc_ic / sigma


def _reference(x_nchw, wq, bq, wk, bk, wv, bv, gamma):
    """Pure-JAX f32 reference mirroring the PyTorch forward (for validation)."""
    B, C, W, H = x_nchw.shape
    N = W * H
    xf = x_nchw.reshape(B, C, N).astype(jnp.float32)
    q = jnp.einsum('oc,bcn->bon', wq, xf) + bq.reshape(1, -1, 1)          # (B, Cq, N)
    k = jnp.einsum('oc,bcn->bon', wk, xf) + bk.reshape(1, -1, 1)
    v = jnp.einsum('oc,bcn->bon', wv, xf) + bv.reshape(1, -1, 1)          # (B, C, N)
    energy = jnp.einsum('bci,bcj->bij', q, k)                             # (B, N, N)
    att = jax.nn.softmax(energy, axis=-1)
    out = jnp.einsum('bcj,bij->bci', v, att)                              # (B, C, N)
    return (gamma * out + xf).reshape(B, C, W, H)


if __name__ == "__main__":
    key = jax.random.PRNGKey(0)
    B, C, W, H = 2, 32, 8, 8        # in_dim = 32 -> C//8 = 4; N = 64
    Cq = C // 8

    k_x, k_wq, k_bq, k_wk, k_bk, k_wv, k_bv = jax.random.split(key, 7)
    x = jax.random.normal(k_x, (B, C, W, H), dtype=jnp.float32)

    # Conv2d weights are (C_out, C_in, 1, 1) in torch; build (C_out, C_in)
    # matrices and spectrally normalize them (kernel uses this native layout).
    wq = _spectral_normalize(jax.random.normal(k_wq, (Cq, C)) * 0.1)
    wk = _spectral_normalize(jax.random.normal(k_wk, (Cq, C)) * 0.1)
    wv = _spectral_normalize(jax.random.normal(k_wv, (C, C)) * 0.1)
    bq = jax.random.normal(k_bq, (Cq,)) * 0.1
    bk = jax.random.normal(k_bk, (Cq,)) * 0.1
    bv = jax.random.normal(k_bv, (C,)) * 0.1

    # torch initializes gamma = 0 (output == x); also test a nonzero gamma so
    # the attention path is actually exercised.  Tolerance reflects the bf16
    # MXU operands (f32 accumulation).
    for gamma_val in (0.0, 0.7):
        gamma = jnp.array(gamma_val, dtype=jnp.float32)
        out = jax.block_until_ready(
            self_attention_pallas(x, wq, bq, wk, bk, wv, bv, gamma))
        ref = _reference(x, wq, bq, wk, bk, wv, bv, gamma)
        assert out.shape == (B, C, W, H)
        err = float(jnp.max(jnp.abs(out - ref)))
        assert jnp.allclose(out, ref, atol=5e-2, rtol=5e-2), (
            f"mismatch at gamma={gamma_val}: max err {err}")

    print("KERNEL_OK")
</pallas_src>

<mosaic_0001>
module attributes {stable_mosaic.version = 11 : i64} {
  func.func @kernel(%arg0: i32, %arg1: i32, %arg2: memref<1x1xf32, #tpu.memory_space<smem>>, %arg3: memref<1x32x64xf32, #tpu.memory_space<vmem>>, %arg4: memref<8x32xbf16, #tpu.memory_space<vmem>>, %arg5: memref<8x1xf32, #tpu.memory_space<vmem>>, %arg6: memref<48x32xbf16, #tpu.memory_space<vmem>>, %arg7: memref<48x1xf32, #tpu.memory_space<vmem>>, %arg8: memref<1x32x64xf32, #tpu.memory_space<vmem>>, %arg9: memref<40x64xbf16, #tpu.memory_space<vmem>>, %arg10: memref<8x64xbf16, #tpu.memory_space<vmem>>) attributes {dimension_semantics = [#tpu.dimension_semantics<parallel>, #tpu.dimension_semantics<arbitrary>], iteration_bounds = array<i64: 2, 1>, scalar_prefetch = 0 : i64, scratch_operands = 2 : i64, tpu.core_type = #tpu.core_type<tc>, window_params = [{transform_indices = @transform_0, window_bounds = array<i64: 1, 1>}, {transform_indices = @transform_1, window_bounds = array<i64: 1, 32, 64>}, {pipeline_mode = #tpu.pipeline_mode<synchronous>, transform_indices = @transform_2, window_bounds = array<i64: 8, 32>}, {pipeline_mode = #tpu.pipeline_mode<synchronous>, transform_indices = @transform_3, window_bounds = array<i64: 8, 1>}, {pipeline_mode = #tpu.pipeline_mode<synchronous>, transform_indices = @transform_4, window_bounds = array<i64: 48, 32>}, {pipeline_mode = #tpu.pipeline_mode<synchronous>, transform_indices = @transform_5, window_bounds = array<i64: 48, 1>}, {transform_indices = @transform_6, window_bounds = array<i64: 1, 32, 64>}]} {
    %c0_i32 = arith.constant 0 : i32
    %0 = arith.cmpi eq, %arg1, %c0_i32 : i32
    %1 = arith.extui %0 : i1 to i32
    %c0_i32_0 = arith.constant 0 : i32
    %2 = arith.cmpi ne, %1, %c0_i32_0 : i32
    scf.if %2 {
      %c0_19 = arith.constant 0 : index
      %c0_20 = arith.constant 0 : index
      %c0_21 = arith.constant 0 : index
      %34 = vector.load %arg3[%c0_19, %c0_20, %c0_21] : memref<1x32x64xf32, #tpu.memory_space<vmem>>, vector<1x32x64xf32>
      %35 = vector.shape_cast %34 : vector<1x32x64xf32> to vector<32x64xf32>
      %36 = arith.truncf %35 : vector<32x64xf32> to vector<32x64xbf16>
      %c0_22 = arith.constant 0 : index
      %c0_23 = arith.constant 0 : index
      %37 = vector.load %arg6[%c0_22, %c0_23] : memref<48x32xbf16, #tpu.memory_space<vmem>>, vector<48x32xbf16>
      %cst_24 = arith.constant dense<0.000000e+00> : vector<48x64xf32>
      %38 = tpu.matmul %37, %36, %cst_24 {dimension_numbers = #tpu.dot_dimension_numbers<[1], [0], [0], [1], [0, 0, 1, 1], [], []>} : vector<48x32xbf16>, vector<32x64xbf16>, vector<48x64xf32> -> vector<48x64xf32>
      %c0_25 = arith.constant 0 : index
      %c0_26 = arith.constant 0 : index
      %39 = vector.load %arg7[%c0_25, %c0_26] : memref<48x1xf32, #tpu.memory_space<vmem>>, vector<48x1xf32>
      %40 = vector.broadcast %39 : vector<48x1xf32> to vector<48x64xf32>
      %41 = arith.addf %38, %40 : vector<48x64xf32>
      %42 = vector.extract_strided_slice %41 {offsets = [0, 0], sizes = [40, 64], strides = [1, 1]} : vector<48x64xf32> to vector<40x64xf32>
      %43 = arith.truncf %42 : vector<40x64xf32> to vector<40x64xbf16>
      %c0_27 = arith.constant 0 : index
      %c0_28 = arith.constant 0 : index
      %44 = vector.load %arg9[%c0_27, %c0_28] : memref<40x64xbf16, #tpu.memory_space<vmem>>, vector<40x64xbf16>
      tpu.vector_store %arg9[%c0_27, %c0_28], %43 {strides = array<i32>} : memref<40x64xbf16, #tpu.memory_space<vmem>>, vector<40x64xbf16>,
      %45 = vector.extract_strided_slice %41 {offsets = [40, 0], sizes = [8, 64], strides = [1, 1]} : vector<48x64xf32> to vector<8x64xf32>
      %46 = arith.truncf %45 : vector<8x64xf32> to vector<8x64xbf16>
      %c0_29 = arith.constant 0 : index
      %c0_30 = arith.constant 0 : index
      %47 = vector.load %arg10[%c0_29, %c0_30] : memref<8x64xbf16, #tpu.memory_space<vmem>>, vector<8x64xbf16>
      tpu.vector_store %arg10[%c0_29, %c0_30], %46 {strides = array<i32>} : memref<8x64xbf16, #tpu.memory_space<vmem>>, vector<8x64xbf16>,
    } else {
    }
    %c0 = arith.constant 0 : index
    %c0_1 = arith.constant 0 : index
    %c0_2 = arith.constant 0 : index
    %3 = vector.load %arg3[%c0, %c0_1, %c0_2] : memref<1x32x64xf32, #tpu.memory_space<vmem>>, vector<1x32x64xf32>
    %4 = vector.shape_cast %3 : vector<1x32x64xf32> to vector<32x64xf32>
    %c0_3 = arith.constant 0 : index
    %c0_4 = arith.constant 0 : index
    %5 = vector.load %arg4[%c0_3, %c0_4] : memref<8x32xbf16, #tpu.memory_space<vmem>>, vector<8x32xbf16>
    %6 = arith.truncf %4 : vector<32x64xf32> to vector<32x64xbf16>
    %cst = arith.constant dense<0.000000e+00> : vector<8x64xf32>
    %7 = tpu.matmul %5, %6, %cst {dimension_numbers = #tpu.dot_dimension_numbers<[1], [0], [0], [1], [0, 0, 1, 1], [], []>} : vector<8x32xbf16>, vector<32x64xbf16>, vector<8x64xf32> -> vector<8x64xf32>
    %c0_5 = arith.constant 0 : index
    %c0_6 = arith.constant 0 : index
    %8 = vector.load %arg5[%c0_5, %c0_6] : memref<8x1xf32, #tpu.memory_space<vmem>>, vector<8x1xf32>
    %9 = vector.broadcast %8 : vector<8x1xf32> to vector<8x64xf32>
    %10 = arith.addf %7, %9 : vector<8x64xf32>
    %11 = arith.truncf %10 : vector<8x64xf32> to vector<8x64xbf16>
    %c0_7 = arith.constant 0 : index
    %c0_8 = arith.constant 0 : index
    %12 = vector.load %arg10[%c0_7, %c0_8] : memref<8x64xbf16, #tpu.memory_space<vmem>>, vector<8x64xbf16>
    %cst_9 = arith.constant dense<0.000000e+00> : vector<64x64xf32>
    %13 = tpu.matmul %11, %12, %cst_9 {dimension_numbers = #tpu.dot_dimension_numbers<[0], [0], [1], [1], [0, 1, 1, 1], [], []>} : vector<8x64xbf16>, vector<8x64xbf16>, vector<64x64xf32> -> vector<64x64xf32>
    %cst_10 = arith.constant dense<0xFF800000> : vector<64xf32>
    %14 = vector.multi_reduction <maximumf>, %13, %cst_10 [1] : vector<64x64xf32> to vector<64xf32>
    %15 = vector.shape_cast %14 : vector<64xf32> to vector<64x1xf32>
    %16 = vector.broadcast %15 : vector<64x1xf32> to vector<64x64xf32>
    %17 = arith.subf %13, %16 : vector<64x64xf32>
    %18 = math.exp %17 : vector<64x64xf32>
    %19 = arith.truncf %18 : vector<64x64xf32> to vector<64x64xbf16>
    %c0_11 = arith.constant 0 : index
    %c0_12 = arith.constant 0 : index
    %20 = vector.load %arg9[%c0_11, %c0_12] : memref<40x64xbf16, #tpu.memory_space<vmem>>, vector<40x64xbf16>
    %cst_13 = arith.constant dense<0.000000e+00> : vector<40x64xf32>
    %21 = tpu.matmul %20, %19, %cst_13 {dimension_numbers = #tpu.dot_dimension_numbers<[1], [1], [0], [0], [0, 0, 1, 0], [], []>} : vector<40x64xbf16>, vector<64x64xbf16>, vector<40x64xf32> -> vector<40x64xf32>
    %22 = vector.extract_strided_slice %21 {offsets = [0, 0], sizes = [32, 64], strides = [1, 1]} : vector<40x64xf32> to vector<32x64xf32>
    %23 = vector.extract_strided_slice %21 {offsets = [32, 0], sizes = [1, 64], strides = [1, 1]} : vector<40x64xf32> to vector<1x64xf32>
    %24 = tpu.reciprocal %23 : vector<1x64xf32> -> vector<1x64xf32>
    %c0_14 = arith.constant 0 : index
    %c0_15 = arith.constant 0 : index
    %25 = memref.load %arg2[%c0_14, %c0_15] : memref<1x1xf32, #tpu.memory_space<smem>>
    %26 = vector.broadcast %24 : vector<1x64xf32> to vector<32x64xf32>
    %27 = arith.mulf %22, %26 : vector<32x64xf32>
    %28 = vector.broadcast %25 : f32 to vector<32x64xf32>
    %29 = arith.mulf %28, %27 : vector<32x64xf32>
    %30 = arith.addf %29, %4 : vector<32x64xf32>
    %c0_16 = arith.constant 0 : index
    %c0_17 = arith.constant 0 : index
    %c0_18 = arith.constant 0 : index
    %31 = vector.load %arg8[%c0_16, %c0_17, %c0_18] : memref<1x32x64xf32, #tpu.memory_space<vmem>>, vector<1x32x64xf32>
    %32 = vector.shape_cast %31 : vector<1x32x64xf32> to vector<32x64xf32>
    %33 = vector.shape_cast %30 : vector<32x64xf32> to vector<1x32x64xf32>
    tpu.vector_store %arg8[%c0_16, %c0_17, %c0_18], %33 {strides = array<i32>} : memref<1x32x64xf32, #tpu.memory_space<vmem>>, vector<1x32x64xf32>,
    return
  }
  func.func @transform_0(%arg0: i32, %arg1: i32) -> (i32, i32) {
    %c0_i32 = arith.constant 0 : i32
    %c0_i32_0 = arith.constant 0 : i32
    %c0_i32_1 = arith.constant 0 : i32
    return %c0_i32, %c0_i32_0 : i32, i32
  }
  func.func @transform_1(%arg0: i32, %arg1: i32) -> (i32, i32, i32) {
    %c0_i32 = arith.constant 0 : i32
    %c0_i32_0 = arith.constant 0 : i32
    %c0_i32_1 = arith.constant 0 : i32
    return %arg0, %c0_i32, %c0_i32_0 : i32, i32, i32
  }
  func.func @transform_2(%arg0: i32, %arg1: i32) -> (i32, i32) {
    %c0_i32 = arith.constant 0 : i32
    %c0_i32_0 = arith.constant 0 : i32
    %c0_i32_1 = arith.constant 0 : i32
    return %c0_i32, %c0_i32_0 : i32, i32
  }
  func.func @transform_3(%arg0: i32, %arg1: i32) -> (i32, i32) {
    %c0_i32 = arith.constant 0 : i32
    %c0_i32_0 = arith.constant 0 : i32
    %c0_i32_1 = arith.constant 0 : i32
    return %c0_i32, %c0_i32_0 : i32, i32
  }
  func.func @transform_4(%arg0: i32, %arg1: i32) -> (i32, i32) {
    %c0_i32 = arith.constant 0 : i32
    %c0_i32_0 = arith.constant 0 : i32
    %c0_i32_1 = arith.constant 0 : i32
    return %c0_i32, %c0_i32_0 : i32, i32
  }
  func.func @transform_5(%arg0: i32, %arg1: i32) -> (i32, i32) {
    %c0_i32 = arith.constant 0 : i32
    %c0_i32_0 = arith.constant 0 : i32
    %c0_i32_1 = arith.constant 0 : i32
    return %c0_i32, %c0_i32_0 : i32, i32
  }
  func.func @transform_6(%arg0: i32, %arg1: i32) -> (i32, i32, i32) {
    %c0_i32 = arith.constant 0 : i32
    %c0_i32_0 = arith.constant 0 : i32
    return %arg0, %c0_i32, %arg1 : i32, i32, i32
  }
}

</mosaic_0001>

<llo_original>
// kernel: tpu_custom_call.1
$region0: #{tpu_custom_call.1}
  #allocation0 [shape = 'u32[]', space=smem, size = 0x4, offset = 0x4, fixed_abs, tag = 'smem constant byte address 0x4 - core index']
  #allocation1 [shape = 'u32[144,128]{1,0:T(1,128)}', space=vmem, size = 0x12000, scoped, tag = 'internal scratch']
  #allocation2 [shape = 'bf16[40,64]{1,0:T(8,128)(2,1)}', space=vmem, size = 0x2800, scoped, tag = 'scratch operand']
  #allocation3 [shape = 'bf16[8,64]{1,0:T(8,128)(2,1)}', space=vmem, size = 0x800, scoped, tag = 'scratch operand']
  #allocation4 [shape = 'f32[1,1]{1,0:T(1,128)S(6)}', space=smem, size = 0x200, scoped, tag = 'scoped memory for tpu_custom_call.1']
  %s0 = inlined_call_operand.<no memory space> [shape: f32[1,1], index: 0, kind: input, shape index: {}]
  %s1 = inlined_call_operand.hbm [shape: f32[2,32,64], index: 1, kind: input, shape index: {}]
  %s2 = inlined_call_operand.hbm [shape: bf16[8,32], index: 2, kind: input, shape index: {}]
  %s3 = inlined_call_operand.hbm [shape: f32[8,1], index: 3, kind: input, shape index: {}]
  %s4 = inlined_call_operand.hbm [shape: bf16[48,32], index: 4, kind: input, shape index: {}]
  %s5 = inlined_call_operand.hbm [shape: f32[48,1], index: 5, kind: input, shape index: {}]
  %s6 = inlined_call_operand.hbm [shape: f32[2,32,64], index: 6, kind: output, shape index: {}]
  %s7 = sld [smem:[#allocation0]]
  $region81: #{tpu_custom_call.1} parent=0
    _
  %s9 = ssub.s32 1, %s7
  %s10 = scalar_select 0, %s9, %s7
  %11 = sst [smem:[#allocation4]] %s0
  $region1: #{tpu_custom_call.1} parent=0
    #allocation5 [shape = 'u8[32768]{0}', space=vmem, size = 0x8000, scoped, tag = 'input window, operand 1']
    #allocation6 [shape = 's32[2]{0}', space=sflag, size = 0x8, scoped, tag = 'scoped memory for tpu_custom_call.1']
    #allocation7 [shape = 's32[2]{0}', space=sflag, size = 0x8, scoped, tag = 'scoped memory for tpu_custom_call.1']
    #allocation8 [shape = 'u8[2048]{0}', space=vmem, size = 0x800, scoped, tag = 'input window, operand 2, single buffered']
    #allocation9 [shape = 's32[1]{0}', space=sflag, size = 0x4, scoped, tag = 'scoped memory for tpu_custom_call.1']
    #allocation10 [shape = 'u8[4096]{0}', space=vmem, size = 0x1000, scoped, tag = 'input window, operand 3, single buffered']
    #allocation11 [shape = 'u8[12288]{0}', space=vmem, size = 0x3000, scoped, tag = 'input window, operand 4, single buffered']
    #allocation12 [shape = 's32[1]{0}', space=sflag, size = 0x4, scoped, tag = 'scoped memory for tpu_custom_call.1']
    #allocation13 [shape = 'u8[24576]{0}', space=vmem, size = 0x6000, scoped, tag = 'input window, operand 5, single buffered']
    #allocation14 [shape = 'u8[32768]{0}', space=vmem, size = 0x8000, scoped, tag = 'output window, operand 0']
    %12 = vsyncpa [#allocation6], 0
    %s13 = scalar_lea.sflag [#allocation6], 1
    %14 = vsyncpa %s13, 0
    %15 = vsyncpa [#allocation9], 0
    %16 = vsyncpa [#allocation12], 0
    %17 = vsyncpa [#allocation7], 0
    %s18 = scalar_lea.sflag [#allocation7], 1
    %19 = vsyncpa %s18, 0
    loop: start=0, step=1, limit=4
    $region2: #{tpu_custom_call.1} parent=1 // loop_pre_header
      _
    $region3: #{tpu_custom_call.1} parent=1 // loop_header
      %s21 = sphi 0, %s25
      %p22 = scmp.ge.s32.totalorder %s21, 4
      %s28 = sphi 0, %s40
      %s29 = sphi 0, %s36
      %s30 = sphi 0, %s28
      %s31 = sphi 0, %s29
      %s32 = sphi 0, %s30
      %s33 = sphi 0, %s31
      %s41 = sphi 0, %s41
      %s43 = sphi 0, %s41
      %s44 = sphi 0, %s43
      %s58 = sphi 0, %s44
      %s64 = sphi 0, %s66
      %s67 = sphi 0, %s64
      %s68 = sphi 0, %s67
      %s84 = sphi 0, %s68
      %s88 = sphi 0, %s88
      %s90 = sphi 0, %s88
      %s91 = sphi 0, %s90
      %s105 = sphi 0, %s91
      %s109 = sphi 0, %s109
      %s111 = sphi 0, %s109
      %s112 = sphi 0, %s111
      %s126 = sphi 0, %s112
      %s130 = sphi 0, %s130
      %s132 = sphi 0, %s130
      %s133 = sphi 0, %s132
      %s147 = sphi 0, %s133
      %s151 = sphi 0, %s151
      %s153 = sphi 0, %s151
      %s154 = sphi 0, %s153
      %s168 = sphi 0, %s154
      %s176 = sphi 0, %s178
      %s179 = sphi 0, %s176
      %s180 = sphi 0, %s179
      %s196 = sphi 0, %s180
    $region4: #{tpu_custom_call.1} parent=1 // loop_header_branch
      %24 = sbr.rel (%p22) target = $region8
    $region5: #{tpu_custom_call.1} parent=1 // loop_body
      %s26 = ssub.s32 %s21, 1
      %s27 = ssub.s32 %s21, 2
      %s34 = sadd.s32 1, %s29
      %p35 = scmp.ge.s32.totalorder %s34, 1
      %s36 = scalar_select %p35, 0, %s34
      %s37 = sadd.s32 1, %s28
      %s38 = scalar_select %p35, %s37, %s28
      %p39 = scmp.ge.s32.totalorder %s38, 2
      %s40 = scalar_select %p39, 0, %s38
      %s42 = sadd.s32 %s41, 1
      %p45 = scmp.eq.s32.totalorder %s21, 1
      %p46 = scmp.ne.s32.totalorder %s41, %s43
      %p47 = scmp.eq.s32.totalorder %s21, 0
      %p48 = por %p46, %p47
      %p49 = scmp.ne.s32.totalorder %s41, %s43
      %p50 = scmp.eq.s32.totalorder %s26, 1
      %p51 = por %p49, %p50
      %p52 = scmp.ne.s32.totalorder %s43, %s44
      %p53 = scmp.eq.s32.totalorder %s26, 0
      %p54 = por %p52, %p53
      %p55 = scmp.ne.s32.totalorder %s43, %s44
      %p56 = scmp.eq.s32.totalorder %s27, 1
      %p57 = por %p55, %p56
      %p59 = scmp.ne.s32.totalorder %s44, %s58
      %p60 = scmp.eq.s32.totalorder %s27, 0
      %p61 = por %p59, %p60
      %s62 = ssub.s32 %s28, %s40
      %p63 = scmp.eq.s32.totalorder %s62, 0
      %s65 = sadd.s32 %s64, 1
      %s66 = scalar_select %p63, %s64, %s65
      %p69 = pneg %p63
      %p70 = scmp.eq.s32.totalorder %s21, 1
      %p71 = por %p69, %p70
      %p72 = scmp.ne.s32.totalorder %s64, %s67
      %p73 = scmp.eq.s32.totalorder %s21, 0
      %p74 = por %p72, %p73
      %p75 = scmp.ne.s32.totalorder %s64, %s67
      %p76 = scmp.eq.s32.totalorder %s26, 1
      %p77 = por %p75, %p76
      %p78 = scmp.ne.s32.totalorder %s67, %s68
      %p79 = scmp.eq.s32.totalorder %s26, 0
      %p80 = por %p78, %p79
      %p81 = scmp.ne.s32.totalorder %s67, %s68
      %p82 = scmp.eq.s32.totalorder %s27, 1
      %p83 = por %p81, %p82
      %p85 = scmp.ne.s32.totalorder %s68, %s84
      %p86 = scmp.eq.s32.totalorder %s27, 0
      %p87 = por %p85, %p86
      %s89 = sadd.s32 %s88, 1
      %p92 = scmp.eq.s32.totalorder %s21, 1
      %p93 = scmp.ne.s32.totalorder %s88, %s90
      %p94 = scmp.eq.s32.totalorder %s21, 0
      %p95 = por %p93, %p94
      %p96 = scmp.ne.s32.totalorder %s88, %s90
      %p97 = scmp.eq.s32.totalorder %s26, 1
      %p98 = por %p96, %p97
      %p99 = scmp.ne.s32.totalorder %s90, %s91
      %p100 = scmp.eq.s32.totalorder %s26, 0
      %p101 = por %p99, %p100
      %p102 = scmp.ne.s32.totalorder %s90, %s91
      %p103 = scmp.eq.s32.totalorder %s27, 1
      %p104 = por %p102, %p103
      %p106 = scmp.ne.s32.totalorder %s91, %s105
      %p107 = scmp.eq.s32.totalorder %s27, 0
      %p108 = por %p106, %p107
      %s110 = sadd.s32 %s109, 1
      %p113 = scmp.eq.s32.totalorder %s21, 1
      %p114 = scmp.ne.s32.totalorder %s109, %s111
      %p115 = scmp.eq.s32.totalorder %s21, 0
      %p116 = por %p114, %p115
      %p117 = scmp.ne.s32.totalorder %s109, %s111
      %p118 = scmp.eq.s32.totalorder %s26, 1
      %p119 = por %p117, %p118
      %p120 = scmp.ne.s32.totalorder %s111, %s112
      %p121 = scmp.eq.s32.totalorder %s26, 0
      %p122 = por %p120, %p121
      %p123 = scmp.ne.s32.totalorder %s111, %s112
      %p124 = scmp.eq.s32.totalorder %s27, 1
      %p125 = por %p123, %p124
      %p127 = scmp.ne.s32.totalorder %s112, %s126
      %p128 = scmp.eq.s32.totalorder %s27, 0
      %p129 = por %p127, %p128
      %s131 = sadd.s32 %s130, 1
      %p134 = scmp.eq.s32.totalorder %s21, 1
      %p135 = scmp.ne.s32.totalorder %s130, %s132
      %p136 = scmp.eq.s32.totalorder %s21, 0
      %p137 = por %p135, %p136
      %p138 = scmp.ne.s32.totalorder %s130, %s132
      %p139 = scmp.eq.s32.totalorder %s26, 1
      %p140 = por %p138, %p139
      %p141 = scmp.ne.s32.totalorder %s132, %s133
      %p142 = scmp.eq.s32.totalorder %s26, 0
      %p143 = por %p141, %p142
      %p144 = scmp.ne.s32.totalorder %s132, %s133
      %p145 = scmp.eq.s32.totalorder %s27, 1
      %p146 = por %p144, %p145
      %p148 = scmp.ne.s32.totalorder %s133, %s147
      %p149 = scmp.eq.s32.totalorder %s27, 0
      %p150 = por %p148, %p149
      %s152 = sadd.s32 %s151, 1
      %p155 = scmp.eq.s32.totalorder %s21, 1
      %p156 = scmp.ne.s32.totalorder %s151, %s153
      %p157 = scmp.eq.s32.totalorder %s21, 0
      %p158 = por %p156, %p157
      %p159 = scmp.ne.s32.totalorder %s151, %s153
      %p160 = scmp.eq.s32.totalorder %s26, 1
      %p161 = por %p159, %p160
      %p162 = scmp.ne.s32.totalorder %s153, %s154
      %p163 = scmp.eq.s32.totalorder %s26, 0
      %p164 = por %p162, %p163
      %p165 = scmp.ne.s32.totalorder %s153, %s154
      %p166 = scmp.eq.s32.totalorder %s27, 1
      %p167 = por %p165, %p166
      %p169 = scmp.ne.s32.totalorder %s154, %s168
      %p170 = scmp.eq.s32.totalorder %s27, 0
      %p171 = por %p169, %p170
      %s172 = ssub.s32 %s28, %s40
      %s173 = ssub.s32 %s29, %s36
      %s174 = sor.u32 %s172, %s173
      %p175 = scmp.eq.s32.totalorder %s174, 0
      %s177 = sadd.s32 %s176, 1
      %s178 = scalar_select %p175, %s176, %s177
      %p181 = pneg %p175
      %p182 = scmp.eq.s32.totalorder %s21, 1
      %p183 = por %p181, %p182
      %p184 = scmp.ne.s32.totalorder %s176, %s179
      %p185 = scmp.eq.s32.totalorder %s21, 0
      %p186 = por %p184, %p185
      %p187 = scmp.ne.s32.totalorder %s176, %s179
      %p188 = scmp.eq.s32.totalorder %s26, 1
      %p189 = por %p187, %p188
      %p190 = scmp.ne.s32.totalorder %s179, %s180
      %p191 = scmp.eq.s32.totalorder %s26, 0
      %p192 = por %p190, %p191
      %p193 = scmp.ne.s32.totalorder %s179, %s180
      %p194 = scmp.eq.s32.totalorder %s27, 1
      %p195 = por %p193, %p194
      %p197 = scmp.ne.s32.totalorder %s180, %s196
      %p198 = scmp.eq.s32.totalorder %s27, 0
      %p199 = por %p197, %p198
      %p200 = scmp.le.s32.totalorder 1, %s21
      %p201 = scmp.lt.s32.totalorder %s21, 3
      %p202 = pnand %p200, %p201
      %p203 = pneg %p202
      // Predicated region
      $region9: #{tpu_custom_call.1} parent=5 // pred_check
        _
      $region10: #{tpu_custom_call.1} parent=5 // pred_check_branch
        %205 = sbr.rel (%p202) target = $region12
      $region11: #{tpu_custom_call.1} parent=5 // pred_region
        %s206 = ssub.s32 %s21, 1
        // Predicated region
        $region13: #{tpu_custom_call.1} parent=11 // pred_check
          %p207 = pneg %p54
        $region14: #{tpu_custom_call.1} parent=11 // pred_check_branch
          %209 = sbr.rel (%p207) target = $region16
        $region15: #{tpu_custom_call.1} parent=11 // pred_region
          _
        $region16: #{tpu_custom_call.1} parent=11 // pred_fallthru
          _
        // Predicated region
        $region17: #{tpu_custom_call.1} parent=11 // pred_check
          %p210 = pneg %p101
        $region18: #{tpu_custom_call.1} parent=11 // pred_check_branch
          %212 = sbr.rel (%p210) target = $region20
        $region19: #{tpu_custom_call.1} parent=11 // pred_region
          %s214 = ssub.s32 64, 64
          %215 = vsyncadd [#allocation9], %s214
          %s217 = sshll.u32 [#allocation8], 4
          %s218 = int_to_ptr.vmem [resolvable:$true] %s217
          %220 = dma.hbm_to_vmem [thread:$0]  %s2, 64, %s218, [#allocation9]
        $region20: #{tpu_custom_call.1} parent=11 // pred_fallthru
          _
        // Predicated region
        $region21: #{tpu_custom_call.1} parent=11 // pred_check
          %p221 = pneg %p122
        $region22: #{tpu_custom_call.1} parent=11 // pred_check_branch
          %223 = sbr.rel (%p221) target = $region24
        $region23: #{tpu_custom_call.1} parent=11 // pred_region
          %s225 = ssub.s32 128, 128
          %226 = vsyncadd [#allocation9], %s225
          %s228 = sshll.u32 [#allocation10], 4
          %s229 = int_to_ptr.vmem [resolvable:$true] %s228
          %231 = dma.hbm_to_vmem [thread:$0]  %s3, 128, %s229, [#allocation9]
        $region24: #{tpu_custom_call.1} parent=11 // pred_fallthru
          _
        // Predicated region
        $region25: #{tpu_custom_call.1} parent=11 // pred_check
          %p232 = pneg %p143
        $region26: #{tpu_custom_call.1} parent=11 // pred_check_branch
          %234 = sbr.rel (%p232) target = $region28
        $region27: #{tpu_custom_call.1} parent=11 // pred_region
          %s236 = ssub.s32 384, 384
          %237 = vsyncadd [#allocation12], %s236
          %s238 = sshll.u32 [#allocation11], 4
          %s239 = int_to_ptr.vmem [resolvable:$true] %s238
          %244 = dma.hbm_to_vmem [thread:$0]  %s4, 384, %s239, [#allocation12], 64, 64, 4
        $region28: #{tpu_custom_call.1} parent=11 // pred_fallthru
          _
        // Predicated region
        $region29: #{tpu_custom_call.1} parent=11 // pred_check
          %p245 = pneg %p164
        $region30: #{tpu_custom_call.1} parent=11 // pred_check_branch
          %247 = sbr.rel (%p245) target = $region32
        $region31: #{tpu_custom_call.1} parent=11 // pred_region
          %s249 = ssub.s32 768, 768
          %250 = vsyncadd [#allocation12], %s249
          %s251 = sshll.u32 [#allocation13], 4
          %s252 = int_to_ptr.vmem [resolvable:$true] %s251
          %257 = dma.hbm_to_vmem [thread:$0]  %s5, 768, %s252, [#allocation12], 128, 128, 8
        $region32: #{tpu_custom_call.1} parent=11 // pred_fallthru
          _
      $region12: #{tpu_custom_call.1} parent=5 // pred_fallthru
        _
      %p258 = scmp.lt.s32.totalorder %s21, 2
      // Predicated region
      $region33: #{tpu_custom_call.1} parent=5 // pred_check
        %p259 = pneg %p258
      $region34: #{tpu_custom_call.1} parent=5 // pred_check_branch
        %261 = sbr.rel (%p259) target = $region36
      $region35: #{tpu_custom_call.1} parent=5 // pred_region
        // Predicated region
        $region37: #{tpu_custom_call.1} parent=35 // pred_check
          %p262 = pneg %p74
        $region38: #{tpu_custom_call.1} parent=35 // pred_check_branch
          %264 = sbr.rel (%p262) target = $region40
        $region39: #{tpu_custom_call.1} parent=35 // pred_region
          %s265 = sand.u32 %s64, 1
          %s266 = scalar_lea.sflag [#allocation6], %s265
          %s267 = sand.u32 %s64, 1
          %s268 = smul.addr %s267, 32
          %s269 = scalar_lea.vmem [#allocation5], %s268
          %s271 = ssub.s32 512, 512
          %272 = vsyncadd %s266, %s271
          %s273 = smul.addr %s28, 4
          %s274 = smul.addr %s273, 128
          %s275 = scalar_lea.hbm %s1, %s274
          %s276 = sshll.u32 %s269, 4
          %s277 = int_to_ptr.vmem [resolvable:$true] %s276
          %282 = dma.hbm_to_vmem [thread:$0]  %s275, 512, %s277, %s266, 128, 128, 8
        $region40: #{tpu_custom_call.1} parent=35 // pred_fallthru
          _
      $region36: #{tpu_custom_call.1} parent=5 // pred_fallthru
        _
      %p283 = scmp.le.s32.totalorder 1, %s21
      %p284 = scmp.lt.s32.totalorder %s21, 3
      %p285 = pnand %p283, %p284
      %p286 = pneg %p285
      // Predicated region
      $region41: #{tpu_custom_call.1} parent=5 // pred_check
        _
      $region42: #{tpu_custom_call.1} parent=5 // pred_check_branch
        %288 = sbr.rel (%p285) target = $region44
      $region43: #{tpu_custom_call.1} parent=5 // pred_region
        %s289 = ssub.s32 %s21, 1
        %s290 = sand.u32 %s67, 1
        %s291 = scalar_lea.sflag [#allocation6], %s290
        %s292 = sand.u32 %s67, 1
        %s293 = smul.addr %s292, 32
        %s294 = scalar_lea.vmem [#allocation5], %s293
        // Predicated region
        $region45: #{tpu_custom_call.1} parent=43 // pred_check
          %p295 = pneg %p80
        $region46: #{tpu_custom_call.1} parent=43 // pred_check_branch
          %297 = sbr.rel (%p295) target = $region48
        $region47: #{tpu_custom_call.1} parent=43 // pred_region
          %298 = dma.done %s291, 512
        $region48: #{tpu_custom_call.1} parent=43 // pred_fallthru
          _
        // Predicated region
        $region49: #{tpu_custom_call.1} parent=43 // pred_check
          %p299 = pneg %p101
        $region50: #{tpu_custom_call.1} parent=43 // pred_check_branch
          %301 = sbr.rel (%p299) target = $region52
        $region51: #{tpu_custom_call.1} parent=43 // pred_region
          %302 = dma.done [#allocation9], 64
        $region52: #{tpu_custom_call.1} parent=43 // pred_fallthru
          _
        // Predicated region
        $region53: #{tpu_custom_call.1} parent=43 // pred_check
          %p303 = pneg %p122
        $region54: #{tpu_custom_call.1} parent=43 // pred_check_branch
          %305 = sbr.rel (%p303) target = $region56
        $region55: #{tpu_custom_call.1} parent=43 // pred_region
          %306 = dma.done [#allocation9], 128
        $region56: #{tpu_custom_call.1} parent=43 // pred_fallthru
          _
        // Predicated region
        $region57: #{tpu_custom_call.1} parent=43 // pred_check
          %p307 = pneg %p143
        $region58: #{tpu_custom_call.1} parent=43 // pred_check_branch
          %309 = sbr.rel (%p307) target = $region60
        $region59: #{tpu_custom_call.1} parent=43 // pred_region
          %310 = dma.done [#allocation12], 384
        $region60: #{tpu_custom_call.1} parent=43 // pred_fallthru
          _
        // Predicated region
        $region61: #{tpu_custom_call.1} parent=43 // pred_check
          %p311 = pneg %p164
        $region62: #{tpu_custom_call.1} parent=43 // pred_check_branch
          %313 = sbr.rel (%p311) target = $region64
        $region63: #{tpu_custom_call.1} parent=43 // pred_region
          %314 = dma.done [#allocation12], 768
        $region64: #{tpu_custom_call.1} parent=43 // pred_fallthru
          _
        %p315 = pneg %p54
        %p316 = pneg %p51
        %s317 = sand.u32 %s67, 1
        %s318 = scalar_lea.sflag [#allocation6], %s317
        %s319 = sand.u32 %s67, 1
        %s320 = smul.addr %s319, 32
        %s321 = scalar_lea.vmem [#allocation5], %s320
        %p322 = pneg %p80
        %p323 = pneg %p77
        %p324 = pneg %p101
        %p325 = pneg %p98
        %p326 = pneg %p122
        %p327 = pneg %p119
        %p328 = pneg %p143
        %p329 = pneg %p140
        %p330 = pneg %p164
        %p331 = pneg %p161
        %p332 = pneg %p192
        %p333 = pneg %p189
        %s334 = sand.u32 %s179, 1
        %s335 = scalar_lea.sflag [#allocation7], %s334
        %s336 = sand.u32 %s179, 1
        %s337 = smul.addr %s336, 32
        %s338 = scalar_lea.vmem [#allocation14], %s337
        %p340 = scmp.eq.s32.totalorder %s31, 0
        // Predicated region
        $region65: #{tpu_custom_call.1} parent=43 // pred_check
          %p341 = pneg %p340
        $region66: #{tpu_custom_call.1} parent=43 // pred_check_branch
          %343 = sbr.rel (%p341) target = $region68
        $region67: #{tpu_custom_call.1} parent=43 // pred_region
          %v344 = vld [vmem:[%s294] sm:$0xff]
          %v345 = vld [vmem:[%s294 + $0x8] sm:$0xff]
          %v346 = vld [vmem:[%s294 + $0x10] sm:$0xff]
          %v347 = vld [vmem:[%s294 + $0x18] sm:$0xff]
          %v348 = vpack.c.bf16 %v345, %v344
          %v349 = vpack.c.bf16 %v347, %v346
          %v350 = vld [vmem:[#allocation11] sm:$0xf]
          %v351 = vld [vmem:[#allocation11 + $0x4] sm:$0xf]
          %v352 = vld [vmem:[#allocation11 + $0x8] sm:$0xf]
          %v353 = vld [vmem:[#allocation11 + $0xc] sm:$0xf]
          %v354 = vld [vmem:[#allocation11 + $0x10] sm:$0xf]
          %v355 = vld [vmem:[#allocation11 + $0x14] sm:$0xf]
          %v356 = vld [vmem:[#allocation13] sm:$0xff]
          %v357 = vld [vmem:[#allocation13 + $0x8] sm:$0xff]
          %v358 = vld [vmem:[#allocation13 + $0x10] sm:$0xff]
          %v359 = vld [vmem:[#allocation13 + $0x18] sm:$0xff]
          %v360 = vld [vmem:[#allocation13 + $0x20] sm:$0xff]
          %v361 = vld [vmem:[#allocation13 + $0x28] sm:$0xff]
          %363 = vset.pattern.permute.xlu0 0
          %364 = vperm.xlu0 %363, %v356
          %v365 = vpop.permute.xlu0 %364
          %368 = vset.pattern.permute.xlu0 0
          %369 = vperm.xlu0 %368, %v357
          %v370 = vpop.permute.xlu0 %369
          %373 = vset.pattern.permute.xlu0 0
          %374 = vperm.xlu0 %373, %v358
          %v375 = vpop.permute.xlu0 %374
          %378 = vset.pattern.permute.xlu0 0
          %379 = vperm.xlu0 %378, %v359
          %v380 = vpop.permute.xlu0 %379
          %383 = vset.pattern.permute.xlu0 0
          %384 = vperm.xlu0 %383, %v360
          %v385 = vpop.permute.xlu0 %384
          %388 = vset.pattern.permute.xlu0 0
          %389 = vperm.xlu0 %388, %v361
          %v390 = vpop.permute.xlu0 %389
          %v398 = vunpack.c.l.b16 %v350
          %v399 = vunpack.c.l.b16 %v351
          %v400 = vunpack.c.l.b16 %v352
          %v401 = vunpack.c.l.b16 %v353
          %v402 = vunpack.c.l.b16 %v354
          %v403 = vunpack.c.l.b16 %v355
          %v404 = vpack.c.b16 %v399, %v398
          %v405 = vpack.c.b16 %v401, %v400
          %v406 = vpack.c.b16 %v403, %v402
          %vm407 = vcmask 261120
          %v409 = vsel %vm407, %v404, 0
          %v412 = vsel %vm407, %v405, 0
          %v415 = vsel %vm407, %v406, 0
          %417 = vmatprep.subr.bf16.mxu0 0
          %418 = vmatpush1.bf16.msra.mxu0 %v348
          %419 = vmatprep.subr.bf16.mxu0 0
          %420 = vmatpush1.bf16.msra.mxu0 %v349
          %421 = vmatprep.subr.bf16.mxu0 0
          %422 = vmatpush1.bf16.msra.mxu0 0
          %423 = vmatprep.subr.bf16.mxu0 0
          %424 = vmatpush1.bf16.msra.mxu0 0
          %425 = vmatprep.subr.bf16.mxu0 0
          %426 = vmatpush1.bf16.msra.mxu0 0
          %427 = vmatprep.subr.bf16.mxu0 0
          %428 = vmatpush1.bf16.msra.mxu0 0
          %429 = vmatprep.subr.bf16.mxu0 0
          %430 = vmatpush1.bf16.msra.mxu0 0
          %431 = vmatprep.subr.bf16.mxu0 0
          %432 = vmatpush1.bf16.msra.mxu0 0
          %433 = vmatprep.subr.bf16.mxu0 0
          %434 = vmatpush1.bf16.msra.mxu0 0
          %435 = vmatprep.subr.bf16.mxu0 0
          %436 = vmatpush1.bf16.msra.mxu0 0
          %437 = vmatprep.subr.bf16.mxu0 0
          %438 = vmatpush1.bf16.msra.mxu0 0
          %439 = vmatprep.subr.bf16.mxu0 0
          %440 = vmatpush1.bf16.msra.mxu0 0
          %441 = vmatprep.subr.bf16.mxu0 0
          %442 = vmatpush1.bf16.msra.mxu0 0
          %443 = vmatprep.subr.bf16.mxu0 0
          %444 = vmatpush1.bf16.msra.mxu0 0
          %445 = vmatprep.subr.bf16.mxu0 0
          %446 = vmatpush1.bf16.msra.mxu0 0
          %447 = vmatprep.subr.bf16.mxu0 0
          %448 = vmatpush1.bf16.msra.mxu0 0
          %449 = vmatprep.mubr.bf16.mxu0 0
          %450 = vmatmul.mubr.bf16.gmra.mrb[0].mxu0 %v409
          %v451 = vpop.f32.mrb[0].mxu0
          %v452 = vadd.f32 %v365, %v451
          %v453 = vpop.f32.mrb[0].mxu0
          %v454 = vpop.f32.mrb[0].mxu0
          %v455 = vadd.f32 %v370, %v454
          %v456 = vpop.f32.mrb[0].mxu0
          %457 = vmatprep.mubr.bf16.mxu0 0
          %458 = vmatmul.mubr.bf16.gmra.mrb[0].mxu0 %v412
          %v459 = vpop.f32.mrb[0].mxu0
          %v460 = vadd.f32 %v375, %v459
          %v461 = vpop.f32.mrb[0].mxu0
          %v462 = vpop.f32.mrb[0].mxu0
          %v463 = vadd.f32 %v380, %v462
          %v464 = vpop.f32.mrb[0].mxu0
          %465 = vmatprep.mubr.bf16.mxu0 0
          %466 = vmatmul.mubr.bf16.gmra.mrb[0].mxu0 %v415
          %v467 = vpop.f32.mrb[0].mxu0
          %v468 = vadd.f32 %v385, %v467
          %v469 = vpop.f32.mrb[0].mxu0
          %v470 = vpop.f32.mrb[0].mxu0
          %v471 = vadd.f32 %v390, %v470
          %v472 = vpop.f32.mrb[0].mxu0
          %473 = vdwg.mxu0
          %v474 = vpack.c.bf16 %v455, %v452
          %v475 = vpack.c.bf16 %v463, %v460
          %v476 = vpack.c.bf16 %v468, %v468
          %v480 = vunpack.c.l.b16 %v474
          %v481 = vunpack.c.h.b16 %v474
          %v482 = vunpack.c.l.b16 %v475
          %v483 = vunpack.c.h.b16 %v475
          %v484 = vunpack.c.l.b16 %v476
          %v485 = vpack.c.b16 %v480, %v480
          %v486 = vpack.c.b16 %v481, %v481
          %v487 = vpack.c.b16 %v482, %v482
          %v488 = vpack.c.b16 %v483, %v483
          %v489 = vpack.c.b16 %v484, %v484
          %vm495 = vcmask 519168
          %496 = vst.msk [vmem:[#allocation2] sm:$0xf] %vm495, %v485
          %497 = vst.msk [vmem:[#allocation2 + $0x4] sm:$0xf] %vm495, %v486
          %498 = vst.msk [vmem:[#allocation2 + $0x8] sm:$0xf] %vm495, %v487
          %499 = vst.msk [vmem:[#allocation2 + $0xc] sm:$0xf] %vm495, %v488
          %500 = vst.msk [vmem:[#allocation2 + $0x10] sm:$0xf] %vm495, %v489
          %v501 = vpack.c.bf16 %v471, %v471
          %502 = vst.msk [vmem:[#allocation3] sm:$0xf] %vm495, %v501
        $region68: #{tpu_custom_call.1} parent=43 // pred_fallthru
          _
        %v503 = vld [vmem:[%s294] sm:$0xff]
        %v504 = vld [vmem:[%s294 + $0x8] sm:$0xff]
        %v505 = vld [vmem:[%s294 + $0x10] sm:$0xff]
        %v506 = vld [vmem:[%s294 + $0x18] sm:$0xff]
        %v507 = vld [vmem:[#allocation8] sm:$0xf]
        %v508 = vpack.c.bf16 %v504, %v503
        %v509 = vpack.c.bf16 %v506, %v505
        %v510 = vld [vmem:[#allocation10] sm:$0xff]
        %512 = vset.pattern.permute.xlu0 0
        %513 = vperm.xlu0 %512, %v510
        %v514 = vpop.permute.xlu0 %513
        %vm516 = vcmask 261120
        %v518 = vsel %vm516, %v507, 0
        %520 = vmatprep.subr.bf16.mxu0 0
        %521 = vmatpush1.bf16.msra.mxu0 %v508
        %522 = vmatprep.subr.bf16.mxu0 0
        %523 = vmatpush1.bf16.msra.mxu0 %v509
        %524 = vmatprep.subr.bf16.mxu0 0
        %525 = vmatpush1.bf16.msra.mxu0 0
        %526 = vmatprep.subr.bf16.mxu0 0
        %527 = vmatpush1.bf16.msra.mxu0 0
        %528 = vmatprep.subr.bf16.mxu0 0
        %529 = vmatpush1.bf16.msra.mxu0 0
        %530 = vmatprep.subr.bf16.mxu0 0
        %531 = vmatpush1.bf16.msra.mxu0 0
        %532 = vmatprep.subr.bf16.mxu0 0
        %533 = vmatpush1.bf16.msra.mxu0 0
        %534 = vmatprep.subr.bf16.mxu0 0
        %535 = vmatpush1.bf16.msra.mxu0 0
        %536 = vmatprep.subr.bf16.mxu0 0
        %537 = vmatpush1.bf16.msra.mxu0 0
        %538 = vmatprep.subr.bf16.mxu0 0
        %539 = vmatpush1.bf16.msra.mxu0 0
        %540 = vmatprep.subr.bf16.mxu0 0
        %541 = vmatpush1.bf16.msra.mxu0 0
        %542 = vmatprep.subr.bf16.mxu0 0
        %543 = vmatpush1.bf16.msra.mxu0 0
        %544 = vmatprep.subr.bf16.mxu0 0
        %545 = vmatpush1.bf16.msra.mxu0 0
        %546 = vmatprep.subr.bf16.mxu0 0
        %547 = vmatpush1.bf16.msra.mxu0 0
        %548 = vmatprep.subr.bf16.mxu0 0
        %549 = vmatpush1.bf16.msra.mxu0 0
        %550 = vmatprep.subr.bf16.mxu0 0
        %551 = vmatpush1.bf16.msra.mxu0 0
        %552 = vmatprep.mubr.bf16.mxu0 0
        %553 = vmatmul.mubr.bf16.gmra.mrb[0].mxu0 %v518
        %v554 = vpop.f32.mrb[0].mxu0
        %v555 = vadd.f32 %v514, %v554
        %v556 = vpop.f32.mrb[0].mxu0
        %v557 = vpop.f32.mrb[0].mxu0
        %v558 = vpop.f32.mrb[0].mxu0
        %559 = vdwg.mxu0
        %v560 = vpack.c.bf16 %v555, %v555
        %v561 = vld [vmem:[#allocation3] sm:$0xf]
        %562 = vxpose.xlu0.c.b16.start [1/8] %v560, 128
        %563 = vxpose.xlu0.c.b16.cont [2/8] 0, 128
        %564 = vxpose.xlu0.c.b16.cont [3/8] 0, 128
        %565 = vxpose.xlu0.c.b16.cont [4/8] 0, 128
        %566 = vxpose.xlu0.c.b16.cont [5/8] 0, 128
        %567 = vxpose.xlu0.c.b16.cont [6/8] 0, 128
        %568 = vxpose.xlu0.c.b16.cont [7/8] 0, 128
        %569 = vxpose.xlu0.c.b16.end [8/8] 0, 128
        %v570 = vpop.trf.xlu0
        %v571 = vpop.trf.xlu0
        %v572 = vpop.trf.xlu0
        %v573 = vpop.trf.xlu0
        %v574 = vpop.trf.xlu0
        %v575 = vpop.trf.xlu0
        %v576 = vpop.trf.xlu0
        %v577 = vpop.trf.xlu0
        %vm578 = vcmask 64512
        %v580 = vsel %vm578, %v570, 0
        %v583 = vsel %vm578, %v571, 0
        %v586 = vsel %vm578, %v572, 0
        %v589 = vsel %vm578, %v573, 0
        %vm591 = vcmask 1043456
        %v593 = vsel %vm591, %v561, 0
        %595 = vmatprep.subr.bf16.mxu0 0
        %596 = vmatpush1.bf16.msra.mxu0 %v593
        %597 = vmatprep.subr.bf16.mxu0 0
        %598 = vmatpush1.bf16.msra.mxu0 0
        %599 = vmatprep.subr.bf16.mxu0 0
        %600 = vmatpush1.bf16.msra.mxu0 0
        %601 = vmatprep.subr.bf16.mxu0 0
        %602 = vmatpush1.bf16.msra.mxu0 0
        %603 = vmatprep.subr.bf16.mxu0 0
        %604 = vmatpush1.bf16.msra.mxu0 0
        %605 = vmatprep.subr.bf16.mxu0 0
        %606 = vmatpush1.bf16.msra.mxu0 0
        %607 = vmatprep.subr.bf16.mxu0 0
        %608 = vmatpush1.bf16.msra.mxu0 0
        %609 = vmatprep.subr.bf16.mxu0 0
        %610 = vmatpush1.bf16.msra.mxu0 0
        %611 = vmatprep.subr.bf16.mxu0 0
        %612 = vmatpush1.bf16.msra.mxu0 0
        %613 = vmatprep.subr.bf16.mxu0 0
        %614 = vmatpush1.bf16.msra.mxu0 0
        %615 = vmatprep.subr.bf16.mxu0 0
        %616 = vmatpush1.bf16.msra.mxu0 0
        %617 = vmatprep.subr.bf16.mxu0 0
        %618 = vmatpush1.bf16.msra.mxu0 0
        %619 = vmatprep.subr.bf16.mxu0 0
        %620 = vmatpush1.bf16.msra.mxu0 0
        %621 = vmatprep.subr.bf16.mxu0 0
        %622 = vmatpush1.bf16.msra.mxu0 0
        %623 = vmatprep.subr.bf16.mxu0 0
        %624 = vmatpush1.bf16.msra.mxu0 0
        %625 = vmatprep.subr.bf16.mxu0 0
        %626 = vmatpush1.bf16.msra.mxu0 0
        %627 = vmatprep.mubr.bf16.mxu0 0
        %628 = vmatmul.mubr.bf16.gmra.mrb[0].mxu0 %v580
        %v629 = vpop.f32.mrb[0].mxu0
        %v630 = vadd.f32 0.0, %v629
        %v631 = vpop.f32.mrb[0].mxu0
        %v632 = vpop.f32.mrb[0].mxu0
        %v633 = vadd.f32 0.0, %v632
        %v634 = vpop.f32.mrb[0].mxu0
        %635 = vmatprep.mubr.bf16.mxu0 0
        %636 = vmatmul.mubr.bf16.gmra.mrb[0].mxu0 %v583
        %v637 = vpop.f32.mrb[0].mxu0
        %v638 = vadd.f32 0.0, %v637
        %v639 = vpop.f32.mrb[0].mxu0
        %v640 = vpop.f32.mrb[0].mxu0
        %v641 = vadd.f32 0.0, %v640
        %v642 = vpop.f32.mrb[0].mxu0
        %643 = vmatprep.mubr.bf16.mxu0 0
        %644 = vmatmul.mubr.bf16.gmra.mrb[0].mxu0 %v586
        %v645 = vpop.f32.mrb[0].mxu0
        %v646 = vadd.f32 0.0, %v645
        %v647 = vpop.f32.mrb[0].mxu0
        %v648 = vpop.f32.mrb[0].mxu0
        %v649 = vadd.f32 0.0, %v648
        %v650 = vpop.f32.mrb[0].mxu0
        %651 = vmatprep.mubr.bf16.mxu0 0
        %652 = vmatmul.mubr.bf16.gmra.mrb[0].mxu0 %v589
        %v653 = vpop.f32.mrb[0].mxu0
        %v654 = vadd.f32 0.0, %v653
        %v655 = vpop.f32.mrb[0].mxu0
        %v656 = vpop.f32.mrb[0].mxu0
        %v657 = vadd.f32 0.0, %v656
        %v658 = vpop.f32.mrb[0].mxu0
        %659 = vdwg.mxu0
        %vm660 = vcmask 523264
        %v661 = vsel %vm660, %v630, -inf
        %662 = vmax.xlane.f32.xlu0 %v661
        %v663 = vpop.xlane.xlu0 %662
        %v664 = vsel %vm660, %v633, -inf
        %665 = vmax.xlane.f32.xlu0 %v664
        %v666 = vpop.xlane.xlu0 %665
        %v667 = vsel %vm660, %v638, -inf
        %668 = vmax.xlane.f32.xlu0 %v667
        %v669 = vpop.xlane.xlu0 %668
        %v670 = vsel %vm660, %v641, -inf
        %671 = vmax.xlane.f32.xlu0 %v670
        %v672 = vpop.xlane.xlu0 %671
        %v673 = vsel %vm660, %v646, -inf
        %674 = vmax.xlane.f32.xlu0 %v673
        %v675 = vpop.xlane.xlu0 %674
        %v676 = vsel %vm660, %v649, -inf
        %677 = vmax.xlane.f32.xlu0 %v676
        %v678 = vpop.xlane.xlu0 %677
        %v679 = vsel %vm660, %v654, -inf
        %680 = vmax.xlane.f32.xlu0 %v679
        %v681 = vpop.xlane.xlu0 %680
        %v682 = vsel %vm660, %v657, -inf
        %683 = vmax.xlane.f32.xlu0 %v682
        %v684 = vpop.xlane.xlu0 %683
        %v685 = vsub.f32 %v630, %v663
        %v686 = vsub.f32 %v633, %v666
        %v687 = vsub.f32 %v638, %v669
        %v688 = vsub.f32 %v641, %v672
        %v689 = vsub.f32 %v646, %v675
        %v690 = vsub.f32 %v649, %v678
        %v691 = vsub.f32 %v654, %v681
        %v692 = vsub.f32 %v657, %v684
        %v693 = vmul.f32 %v685, 1.442695
        %v694 = vpow.pop %v693
        %v695 = vmul.f32 %v686, 1.442695
        %v696 = vpow.pop %v695
        %v697 = vmul.f32 %v687, 1.442695
        %v698 = vpow.pop %v697
        %v699 = vmul.f32 %v688, 1.442695
        %v700 = vpow.pop %v699
        %v701 = vmul.f32 %v689, 1.442695
        %v702 = vpow.pop %v701
        %v703 = vmul.f32 %v690, 1.442695
        %v704 = vpow.pop %v703
        %v705 = vmul.f32 %v691, 1.442695
        %v706 = vpow.pop %v705
        %v707 = vmul.f32 %v692, 1.442695
        %v708 = vpow.pop %v707
        %v709 = vpack.c.bf16 %v696, %v694
        %v710 = vpack.c.bf16 %v700, %v698
        %v711 = vpack.c.bf16 %v704, %v702
        %v712 = vpack.c.bf16 %v708, %v706
        %v713 = vld [vmem:[#allocation2] sm:$0xf]
        %v714 = vld [vmem:[#allocation2 + $0x4] sm:$0xf]
        %v715 = vld [vmem:[#allocation2 + $0x8] sm:$0xf]
        %v716 = vld [vmem:[#allocation2 + $0xc] sm:$0xf]
        %v717 = vld [vmem:[#allocation2 + $0x10] sm:$0xf]
        %v723 = vunpack.c.l.b16 %v713
        %v724 = vunpack.c.l.b16 %v714
        %v725 = vunpack.c.l.b16 %v715
        %v726 = vunpack.c.l.b16 %v716
        %v727 = vunpack.c.l.b16 %v717
        %v728 = vpack.c.b16 %v724, %v723
        %v729 = vpack.c.b16 %v726, %v725
        %v730 = vpack.c.b16 %v727, %v727
        %v732 = vsel %vm660, %v728, 0
        %v735 = vsel %vm660, %v729, 0
        %v738 = vsel %vm660, %v730, 0
        %v741 = vsel %vm660, %v709, 0
        %v744 = vsel %vm660, %v710, 0
        %v747 = vsel %vm660, %v711, 0
        %v750 = vsel %vm660, %v712, 0
        %752 = vmatprep.subr.bf16.mxu0 0
        %753 = vmatpush1.bf16.xpose.msra.mxu0 %v741
        %754 = vmatprep.subr.bf16.mxu0 0
        %755 = vmatpush1.bf16.xpose.msra.mxu0 %v744
        %756 = vmatprep.subr.bf16.mxu0 0
        %757 = vmatpush1.bf16.xpose.msra.mxu0 %v747
        %758 = vmatprep.subr.bf16.mxu0 0
        %759 = vmatpush1.bf16.xpose.msra.mxu0 %v750
        %760 = vmatprep.subr.bf16.mxu0 0
        %761 = vmatpush1.bf16.xpose.msra.mxu0 0
        %762 = vmatprep.subr.bf16.mxu0 0
        %763 = vmatpush1.bf16.xpose.msra.mxu0 0
        %764 = vmatprep.subr.bf16.mxu0 0
        %765 = vmatpush1.bf16.xpose.msra.mxu0 0
        %766 = vmatprep.subr.bf16.mxu0 0
        %767 = vmatpush1.bf16.xpose.msra.mxu0 0
        %768 = vmatprep.subr.bf16.mxu0 0
        %769 = vmatpush1.bf16.xpose.msra.mxu0 0
        %770 = vmatprep.subr.bf16.mxu0 0
        %771 = vmatpush1.bf16.xpose.msra.mxu0 0
        %772 = vmatprep.subr.bf16.mxu0 0
        %773 = vmatpush1.bf16.xpose.msra.mxu0 0
        %774 = vmatprep.subr.bf16.mxu0 0
        %775 = vmatpush1.bf16.xpose.msra.mxu0 0
        %776 = vmatprep.subr.bf16.mxu0 0
        %777 = vmatpush1.bf16.xpose.msra.mxu0 0
        %778 = vmatprep.subr.bf16.mxu0 0
        %779 = vmatpush1.bf16.xpose.msra.mxu0 0
        %780 = vmatprep.subr.bf16.mxu0 0
        %781 = vmatpush1.bf16.xpose.msra.mxu0 0
        %782 = vmatprep.subr.bf16.mxu0 0
        %783 = vmatpush1.bf16.xpose.msra.mxu0 0
        %784 = vmatprep.mubr.bf16.mxu0 0
        %785 = vmatmul.mubr.bf16.gmra.mrb[0].mxu0 %v732
        %v786 = vpop.f32.mrb[0].mxu0
        %v787 = vadd.f32 0.0, %v786
        %v788 = vpop.f32.mrb[0].mxu0
        %v789 = vpop.f32.mrb[0].mxu0
        %v790 = vadd.f32 0.0, %v789
        %v791 = vpop.f32.mrb[0].mxu0
        %792 = vmatprep.mubr.bf16.mxu0 0
        %793 = vmatmul.mubr.bf16.gmra.mrb[0].mxu0 %v735
        %v794 = vpop.f32.mrb[0].mxu0
        %v795 = vadd.f32 0.0, %v794
        %v796 = vpop.f32.mrb[0].mxu0
        %v797 = vpop.f32.mrb[0].mxu0
        %v798 = vadd.f32 0.0, %v797
        %v799 = vpop.f32.mrb[0].mxu0
        %800 = vmatprep.mubr.bf16.mxu0 0
        %801 = vmatmul.mubr.bf16.gmra.mrb[0].mxu0 %v738
        %v802 = vpop.f32.mrb[0].mxu0
        %v803 = vadd.f32 0.0, %v802
        %v804 = vpop.f32.mrb[0].mxu0
        %v805 = vpop.f32.mrb[0].mxu0
        %v806 = vpop.f32.mrb[0].mxu0
        %807 = vdwg.mxu0
        %v808 = vrcp.pop %v803
        %s809 = sld [smem:[#allocation4]]
        %v810 = vlaneseq
        %v811 = vshrl.u32 %v810, 7
        %v812 = vsub.s32 0, %v811
        %v813 = vrot.slane %v808, %v812
        %v814 = vmul.f32 %v787, %v813
        %v815 = vmul.f32 %v790, %v813
        %v816 = vmul.f32 %v795, %v813
        %v817 = vmul.f32 %v798, %v813
        %v818 = vstv %s809
        %v819 = vmul.f32 %v818, %v814
        %v820 = vmul.f32 %v818, %v815
        %v821 = vmul.f32 %v818, %v816
        %v822 = vmul.f32 %v818, %v817
        %v823 = vadd.f32 %v819, %v503
        %v824 = vadd.f32 %v820, %v504
        %v825 = vadd.f32 %v821, %v505
        %v826 = vadd.f32 %v822, %v506
        %827 = vst.msk [vmem:[%s338] sm:$0xff] %vm660, %v823
        %828 = vst.msk [vmem:[%s338 + $0x8] sm:$0xff] %vm660, %v824
        %829 = vst.msk [vmem:[%s338 + $0x10] sm:$0xff] %vm660, %v825
        %830 = vst.msk [vmem:[%s338 + $0x18] sm:$0xff] %vm660, %v826
        %s831 = sand.u32 %s179, 1
        %s832 = scalar_lea.sflag [#allocation7], %s831
        %s833 = sand.u32 %s179, 1
        %s834 = smul.addr %s833, 32
        %s835 = scalar_lea.vmem [#allocation14], %s834
        // Predicated region
        $region69: #{tpu_custom_call.1} parent=43 // pred_check
          %p836 = pneg %p189
        $region70: #{tpu_custom_call.1} parent=43 // pred_check_branch
          %838 = sbr.rel (%p836) target = $region72
        $region71: #{tpu_custom_call.1} parent=43 // pred_region
          %s840 = ssub.s32 512, 512
          %841 = vsyncadd %s832, %s840
          %s842 = smul.addr %s30, 4
          %s843 = sadd.s32 %s31, %s842
          %s844 = smul.addr %s843, 128
          %s845 = scalar_lea.hbm %s6, %s844
          %s846 = sshll.u32 %s835, 4
          %s847 = int_to_ptr.vmem [resolvable:$true] %s846
          %852 = dma.vmem_to_hbm [thread:$0]  %s847, 512, %s845, %s832, 128, 128, 8
        $region72: #{tpu_custom_call.1} parent=43 // pred_fallthru
          _
      $region44: #{tpu_custom_call.1} parent=5 // pred_fallthru
        _
      %p853 = scmp.le.s32.totalorder 2, %s21
      // Predicated region
      $region73: #{tpu_custom_call.1} parent=5 // pred_check
        %p854 = pneg %p853
      $region74: #{tpu_custom_call.1} parent=5 // pred_check_branch
        %856 = sbr.rel (%p854) target = $region76
      $region75: #{tpu_custom_call.1} parent=5 // pred_region
        %s857 = ssub.s32 %s21, 2
        // Predicated region
        $region77: #{tpu_custom_call.1} parent=75 // pred_check
          %p858 = pneg %p195
        $region78: #{tpu_custom_call.1} parent=75 // pred_check_branch
          %860 = sbr.rel (%p858) target = $region80
        $region79: #{tpu_custom_call.1} parent=75 // pred_region
          %s861 = sand.u32 %s180, 1
          %s862 = scalar_lea.sflag [#allocation7], %s861
          %s863 = sand.u32 %s180, 1
          %s864 = smul.addr %s863, 32
          %s865 = scalar_lea.vmem [#allocation14], %s864
          %866 = dma.done %s862, 512
        $region80: #{tpu_custom_call.1} parent=75 // pred_fallthru
          _
      $region76: #{tpu_custom_call.1} parent=5 // pred_fallthru
        _
    $region6: #{tpu_custom_call.1} parent=1 // loop_footer
      %s25 = sadd.s32 1, %s21
    $region7: #{tpu_custom_call.1} parent=1 // loop_footer_branch
      %20 = sbr.rel target = $region3
    $region8: #{tpu_custom_call.1} parent=1 // loop_exit
      _
    %867 = vsyncpa [#allocation6], 1
    %s868 = scalar_lea.sflag [#allocation6], 1
    %869 = vsyncpa %s868, 1
    %870 = vsyncpa [#allocation9], 1
    %871 = vsyncpa [#allocation12], 1
    %872 = vsyncpa [#allocation7], 1
    %s873 = scalar_lea.sflag [#allocation7], 1
    %874 = vsyncpa %s873, 1

</llo_original>
